<compile_context>
chip_gen: v7x
topology: tpu7x:2x2x1
jax: 0.10.0
libtpu: 0.0.40
codegen_flags: <defaults>
</compile_context>

<pallas_src>
import jax
import jax.numpy as jnp
from jax.experimental import pallas as pl
from jax.experimental.pallas import tpu as pltpu


def _threshold_kernel(x_ref, taus_ref, o_ref):
    # x_ref   : VMEM block (1, 1, tile_hw), native input dtype
    # taus_ref: VMEM block (T, 1), float32 (same block every step -> no re-DMA)
    # o_ref   : VMEM block (1, T, tile_hw), output dtype
    x = x_ref[...]                    # (1, 1, tile_hw)
    taus = taus_ref[...]              # (T, 1)
    # Broadcasted compare on the VPU: (1,1,hw) >= (1,T,1) -> (1,T,hw)
    o_ref[...] = (x >= taus[None, :, :]).astype(o_ref.dtype)


def thresholder(x: jax.Array, taus: jax.Array, out_dtype=jnp.float32) -> jax.Array:
    """x: (B, 1, H, W); taus: (T, 1, 1) or (T,) -> (B, T, H, W) in `out_dtype`.

    out_dtype defaults to float32 to match PyTorch's .float(); pass bf16/int8
    if downstream allows (kernel is purely output-write bound).
    """
    assert x.ndim == 4 and x.shape[1] == 1, "expected NCHW input with C=1"
    B, _, H, W = x.shape
    taus_flat = jnp.reshape(taus, (-1,)).astype(jnp.float32)
    T = taus_flat.shape[0]
    taus_2d = taus_flat.reshape(T, 1)

    LANE = 128
    hw = H * W
    x_bytes = jnp.dtype(x.dtype).itemsize
    o_bytes = jnp.dtype(out_dtype).itemsize

    # Size the spatial tile: lane-dense (multiple of 128), large enough to hit
    # HBM roofline, small enough that one (input + T*output) block slot stays
    # ~<=6 MiB so double-buffering fits scoped VMEM on all generations
    # (v7x: 64 MiB physical / 32 MiB scoped; v5e default scoped is 16 MiB).
    block_budget = 6 * 1024 * 1024
    per_elem = x_bytes + T * o_bytes
    max_tile = max(LANE, (block_budget // per_elem) // LANE * LANE)
    tile_hw = min(max_tile, 512 * LANE)              # cap; sweep-able
    tile_hw = min(tile_hw, pl.cdiv(hw, LANE) * LANE)  # don't exceed padded map
    hw_pad = pl.cdiv(hw, tile_hw) * tile_hw
    n_hw = hw_pad // tile_hw
    # TODO(synk): for very large T, add a T-blocking grid axis (t innermost,
    # x index_map constant over it) instead of shrinking tile_hw to 128.

    x_flat = x.reshape(B, 1, hw)
    if hw_pad != hw:
        x_flat = jnp.pad(x_flat, ((0, 0), (0, 0), (0, hw_pad - hw)))

    out = pl.pallas_call(
        _threshold_kernel,
        out_shape=jax.ShapeDtypeStruct((B, T, hw_pad), out_dtype),
        grid=(B, n_hw),
        in_specs=[
            # x tile for (batch b, spatial chunk h); native dtype, read once.
            pl.BlockSpec((1, 1, tile_hw), lambda b, h: (b, 0, h)),
            # all thresholds, constant block index -> stays resident in VMEM.
            pl.BlockSpec((T, 1), lambda b, h: (0, 0)),
        ],
        out_specs=pl.BlockSpec((1, T, tile_hw), lambda b, h: (b, 0, h)),
        compiler_params=pltpu.CompilerParams(
            dimension_semantics=("parallel", "parallel"),
            vmem_limit_bytes=32 * 1024 * 1024,
        ),
    )(x_flat, taus_2d)

    if hw_pad != hw:
        out = out[:, :, :hw]
    return out.reshape(B, T, H, W)


def thresholder_ref(x: jax.Array, taus: jax.Array) -> jax.Array:
    # Pure-JAX reference mirroring PyTorch broadcasting: (B,1,H,W) >= (T,1,1)
    return (x >= jnp.reshape(taus, (-1, 1, 1))).astype(jnp.float32)


if __name__ == "__main__":
    key = jax.random.PRNGKey(0)
    B, H, W = 2, 16, 16
    n_taus = 4

    x = jax.random.uniform(key, (B, 1, H, W), dtype=jnp.float32)
    # Deterministic threshold placement (done "outside the class", as in the module docs).
    taus = jnp.linspace(0.2, 0.8, n_taus, dtype=jnp.float32).reshape(n_taus, 1, 1)

    out = thresholder(x, taus)
    out = jax.block_until_ready(out)

    ref = thresholder_ref(x, taus)
    assert out.shape == (B, n_taus, H, W)
    assert out.dtype == jnp.float32
    assert jnp.array_equal(out, ref)

    print("KERNEL_OK")
</pallas_src>

<mosaic_0001>
module attributes {stable_mosaic.version = 11 : i64} {
  func.func @_threshold_kernel(%arg0: i32, %arg1: i32, %arg2: memref<1x1x256xf32, #tpu.memory_space<vmem>>, %arg3: memref<4x1xf32, #tpu.memory_space<vmem>>, %arg4: memref<1x4x256xf32, #tpu.memory_space<vmem>>) attributes {dimension_semantics = [#tpu.dimension_semantics<parallel>, #tpu.dimension_semantics<parallel>], iteration_bounds = array<i64: 2, 1>, scalar_prefetch = 0 : i64, scratch_operands = 0 : i64, tpu.core_type = #tpu.core_type<tc>, window_params = [{transform_indices = @transform_0, window_bounds = array<i64: 1, 1, 256>}, {pipeline_mode = #tpu.pipeline_mode<synchronous>, transform_indices = @transform_1, window_bounds = array<i64: 4, 1>}, {transform_indices = @transform_2, window_bounds = array<i64: 1, 4, 256>}]} {
    %c0 = arith.constant 0 : index
    %c0_0 = arith.constant 0 : index
    %c0_1 = arith.constant 0 : index
    %0 = vector.load %arg2[%c0, %c0_0, %c0_1] : memref<1x1x256xf32, #tpu.memory_space<vmem>>, vector<1x1x256xf32>
    %c0_2 = arith.constant 0 : index
    %c0_3 = arith.constant 0 : index
    %1 = vector.load %arg3[%c0_2, %c0_3] : memref<4x1xf32, #tpu.memory_space<vmem>>, vector<4x1xf32>
    %2 = vector.shape_cast %1 : vector<4x1xf32> to vector<1x4x1xf32>
    %3 = vector.broadcast %0 : vector<1x1x256xf32> to vector<1x4x256xf32>
    %4 = vector.broadcast %2 : vector<1x4x1xf32> to vector<1x4x256xf32>
    %5 = arith.cmpf oge, %3, %4 : vector<1x4x256xf32>
    %6 = arith.extui %5 : vector<1x4x256xi1> to vector<1x4x256xi32>
    %7 = arith.sitofp %6 : vector<1x4x256xi32> to vector<1x4x256xf32>
    %c0_4 = arith.constant 0 : index
    %c0_5 = arith.constant 0 : index
    %c0_6 = arith.constant 0 : index
    %8 = vector.load %arg4[%c0_4, %c0_5, %c0_6] : memref<1x4x256xf32, #tpu.memory_space<vmem>>, vector<1x4x256xf32>
    tpu.vector_store %arg4[%c0_4, %c0_5, %c0_6], %7 {strides = array<i32>} : memref<1x4x256xf32, #tpu.memory_space<vmem>>, vector<1x4x256xf32>,
    return
  }
  func.func @transform_0(%arg0: i32, %arg1: i32) -> (i32, i32, i32) {
    %c0_i32 = arith.constant 0 : i32
    %c0_i32_0 = arith.constant 0 : i32
    return %arg0, %c0_i32, %arg1 : i32, i32, i32
  }
  func.func @transform_1(%arg0: i32, %arg1: i32) -> (i32, i32) {
    %c0_i32 = arith.constant 0 : i32
    %c0_i32_0 = arith.constant 0 : i32
    %c0_i32_1 = arith.constant 0 : i32
    return %c0_i32, %c0_i32_0 : i32, i32
  }
  func.func @transform_2(%arg0: i32, %arg1: i32) -> (i32, i32, i32) {
    %c0_i32 = arith.constant 0 : i32
    %c0_i32_0 = arith.constant 0 : i32
    return %arg0, %c0_i32, %arg1 : i32, i32, i32
  }
}

</mosaic_0001>

<llo_original>
// kernel: tpu_custom_call.1
$region0: #{tpu_custom_call.1}
  #allocation0 [shape = 'u32[]', space=smem, size = 0x4, offset = 0x4, fixed_abs, tag = 'smem constant byte address 0x4 - core index']
  #allocation1 [shape = 'u32[144,128]{1,0:T(1,128)}', space=vmem, size = 0x12000, scoped, tag = 'internal scratch']
  %s0 = inlined_call_operand.vmem [shape: f32[2,1,256], index: 0, kind: input, shape index: {}]
  %s1 = inlined_call_operand.vmem [shape: f32[4,1], index: 1, kind: input, shape index: {}]
  %s2 = inlined_call_operand.hbm [shape: f32[2,4,256], index: 2, kind: output, shape index: {}]
  %s3 = sld [smem:[#allocation0]]
  $region41: #{tpu_custom_call.1} parent=0
    _
  %s5 = ssub.s32 1, %s3
  %s6 = scalar_select 0, %s5, %s3
  $region1: #{tpu_custom_call.1} parent=0
    #allocation2 [shape = 'u8[8192]{0}', space=vmem, size = 0x2000, scoped, tag = 'output window, operand 0']
    #allocation3 [shape = 's32[2]{0}', space=sflag, size = 0x8, scoped, tag = 'scoped memory for tpu_custom_call.1']
    %7 = vsyncpa [#allocation3], 0
    %s8 = scalar_lea.sflag [#allocation3], 1
    %9 = vsyncpa %s8, 0
    loop: start=0, step=1, limit=4
    $region2: #{tpu_custom_call.1} parent=1 // loop_pre_header
      _
    $region3: #{tpu_custom_call.1} parent=1 // loop_header
      %s11 = sphi 0, %s15
      %p12 = scmp.ge.s32.totalorder %s11, 4
      %s18 = sphi 0, %s30
      %s19 = sphi 0, %s26
      %s20 = sphi 0, %s18
      %s21 = sphi 0, %s19
      %s22 = sphi 0, %s20
      %s23 = sphi 0, %s21
      %s35 = sphi 0, %s37
      %s38 = sphi 0, %s35
      %s39 = sphi 0, %s38
      %s55 = sphi 0, %s39
      %s59 = sphi 0, %s59
      %s61 = sphi 0, %s59
      %s62 = sphi 0, %s61
      %s76 = sphi 0, %s62
      %s84 = sphi 0, %s86
      %s87 = sphi 0, %s84
      %s88 = sphi 0, %s87
      %s104 = sphi 0, %s88
    $region4: #{tpu_custom_call.1} parent=1 // loop_header_branch
      %14 = sbr.rel (%p12) target = $region8
    $region5: #{tpu_custom_call.1} parent=1 // loop_body
      %s16 = ssub.s32 %s11, 1
      %s17 = ssub.s32 %s11, 2
      %s24 = sadd.s32 1, %s19
      %p25 = scmp.ge.s32.totalorder %s24, 1
      %s26 = scalar_select %p25, 0, %s24
      %s27 = sadd.s32 1, %s18
      %s28 = scalar_select %p25, %s27, %s18
      %p29 = scmp.ge.s32.totalorder %s28, 2
      %s30 = scalar_select %p29, 0, %s28
      %s31 = ssub.s32 %s18, %s30
      %s32 = ssub.s32 %s19, %s26
      %s33 = sor.u32 %s31, %s32
      %p34 = scmp.eq.s32.totalorder %s33, 0
      %s36 = sadd.s32 %s35, 1
      %s37 = scalar_select %p34, %s35, %s36
      %p40 = pneg %p34
      %p41 = scmp.eq.s32.totalorder %s11, 1
      %p42 = por %p40, %p41
      %p43 = scmp.ne.s32.totalorder %s35, %s38
      %p44 = scmp.eq.s32.totalorder %s11, 0
      %p45 = por %p43, %p44
      %p46 = scmp.ne.s32.totalorder %s35, %s38
      %p47 = scmp.eq.s32.totalorder %s16, 1
      %p48 = por %p46, %p47
      %p49 = scmp.ne.s32.totalorder %s38, %s39
      %p50 = scmp.eq.s32.totalorder %s16, 0
      %p51 = por %p49, %p50
      %p52 = scmp.ne.s32.totalorder %s38, %s39
      %p53 = scmp.eq.s32.totalorder %s17, 1
      %p54 = por %p52, %p53
      %p56 = scmp.ne.s32.totalorder %s39, %s55
      %p57 = scmp.eq.s32.totalorder %s17, 0
      %p58 = por %p56, %p57
      %s60 = sadd.s32 %s59, 1
      %p63 = scmp.eq.s32.totalorder %s11, 1
      %p64 = scmp.ne.s32.totalorder %s59, %s61
      %p65 = scmp.eq.s32.totalorder %s11, 0
      %p66 = por %p64, %p65
      %p67 = scmp.ne.s32.totalorder %s59, %s61
      %p68 = scmp.eq.s32.totalorder %s16, 1
      %p69 = por %p67, %p68
      %p70 = scmp.ne.s32.totalorder %s61, %s62
      %p71 = scmp.eq.s32.totalorder %s16, 0
      %p72 = por %p70, %p71
      %p73 = scmp.ne.s32.totalorder %s61, %s62
      %p74 = scmp.eq.s32.totalorder %s17, 1
      %p75 = por %p73, %p74
      %p77 = scmp.ne.s32.totalorder %s62, %s76
      %p78 = scmp.eq.s32.totalorder %s17, 0
      %p79 = por %p77, %p78
      %s80 = ssub.s32 %s18, %s30
      %s81 = ssub.s32 %s19, %s26
      %s82 = sor.u32 %s80, %s81
      %p83 = scmp.eq.s32.totalorder %s82, 0
      %s85 = sadd.s32 %s84, 1
      %s86 = scalar_select %p83, %s84, %s85
      %p89 = pneg %p83
      %p90 = scmp.eq.s32.totalorder %s11, 1
      %p91 = por %p89, %p90
      %p92 = scmp.ne.s32.totalorder %s84, %s87
      %p93 = scmp.eq.s32.totalorder %s11, 0
      %p94 = por %p92, %p93
      %p95 = scmp.ne.s32.totalorder %s84, %s87
      %p96 = scmp.eq.s32.totalorder %s16, 1
      %p97 = por %p95, %p96
      %p98 = scmp.ne.s32.totalorder %s87, %s88
      %p99 = scmp.eq.s32.totalorder %s16, 0
      %p100 = por %p98, %p99
      %p101 = scmp.ne.s32.totalorder %s87, %s88
      %p102 = scmp.eq.s32.totalorder %s17, 1
      %p103 = por %p101, %p102
      %p105 = scmp.ne.s32.totalorder %s88, %s104
      %p106 = scmp.eq.s32.totalorder %s17, 0
      %p107 = por %p105, %p106
      %p108 = scmp.le.s32.totalorder 1, %s11
      %p109 = scmp.lt.s32.totalorder %s11, 3
      %p110 = pnand %p108, %p109
      %p111 = pneg %p110
      // Predicated region
      $region9: #{tpu_custom_call.1} parent=5 // pred_check
        _
      $region10: #{tpu_custom_call.1} parent=5 // pred_check_branch
        %113 = sbr.rel (%p110) target = $region12
      $region11: #{tpu_custom_call.1} parent=5 // pred_region
        %s114 = ssub.s32 %s11, 1
        // Predicated region
        $region13: #{tpu_custom_call.1} parent=11 // pred_check
          %p115 = pneg %p72
        $region14: #{tpu_custom_call.1} parent=11 // pred_check_branch
          %117 = sbr.rel (%p115) target = $region16
        $region15: #{tpu_custom_call.1} parent=11 // pred_region
          _
        $region16: #{tpu_custom_call.1} parent=11 // pred_fallthru
          _
      $region12: #{tpu_custom_call.1} parent=5 // pred_fallthru
        _
      %p118 = scmp.lt.s32.totalorder %s11, 2
      // Predicated region
      $region17: #{tpu_custom_call.1} parent=5 // pred_check
        %p119 = pneg %p118
      $region18: #{tpu_custom_call.1} parent=5 // pred_check_branch
        %121 = sbr.rel (%p119) target = $region20
      $region19: #{tpu_custom_call.1} parent=5 // pred_region
        // Predicated region
        $region21: #{tpu_custom_call.1} parent=19 // pred_check
          %p122 = pneg %p45
        $region22: #{tpu_custom_call.1} parent=19 // pred_check_branch
          %124 = sbr.rel (%p122) target = $region24
        $region23: #{tpu_custom_call.1} parent=19 // pred_region
          %s125 = smul.u32 2, %s19
          %p126 = scmp.lt.s32.totalorder %s18, 1
          %s127 = scalar_select %p126, %s18, 1
          %p128 = scmp.lt.s32.totalorder %s125, 1
          %s129 = scalar_select %p128, %s125, 1
          %s130 = smul.addr %s127, 2
          %s131 = sadd.s32 %s129, %s130
          %s132 = scalar_lea.vmem %s0, %s131
          %s133 = smul.u32 2, %s19
        $region24: #{tpu_custom_call.1} parent=19 // pred_fallthru
          _
      $region20: #{tpu_custom_call.1} parent=5 // pred_fallthru
        _
      %p134 = scmp.le.s32.totalorder 1, %s11
      %p135 = scmp.lt.s32.totalorder %s11, 3
      %p136 = pnand %p134, %p135
      %p137 = pneg %p136
      // Predicated region
      $region25: #{tpu_custom_call.1} parent=5 // pred_check
        _
      $region26: #{tpu_custom_call.1} parent=5 // pred_check_branch
        %139 = sbr.rel (%p136) target = $region28
      $region27: #{tpu_custom_call.1} parent=5 // pred_region
        %s140 = ssub.s32 %s11, 1
        %s141 = smul.u32 2, %s21
        %p142 = scmp.lt.s32.totalorder %s20, 1
        %s143 = scalar_select %p142, %s20, 1
        %p144 = scmp.lt.s32.totalorder %s141, 1
        %s145 = scalar_select %p144, %s141, 1
        %s146 = smul.addr %s143, 2
        %s147 = sadd.s32 %s145, %s146
        %s148 = scalar_lea.vmem %s0, %s147
        %p149 = pneg %p51
        %p150 = pneg %p48
        %p151 = pneg %p72
        %p152 = pneg %p69
        %p153 = pneg %p100
        %p154 = pneg %p97
        %s155 = sand.u32 %s87, 1
        %s156 = scalar_lea.sflag [#allocation3], %s155
        %s157 = sand.u32 %s87, 1
        %s158 = smul.addr %s157, 8
        %s159 = scalar_lea.vmem [#allocation2], %s158
        %s160 = smul.u32 2, %s21
        %p161 = scmp.lt.s32.totalorder %s20, 1
        %s162 = scalar_select %p161, %s20, 1
        %p163 = scmp.lt.s32.totalorder %s160, 1
        %s164 = scalar_select %p163, %s160, 1
        %s165 = smul.addr %s162, 2
        %s166 = sadd.s32 %s164, %s165
        %s167 = scalar_lea.vmem %s0, %s166
        %s168 = smul.u32 2, %s21
        %s169 = smul.u32 2, %s21
        %v170 = vld [vmem:[%s167] sm:$0x3]
        %v171 = vld [vmem:[%s1] sm:$0xf]
        %v173 = vlaneseq
        %v174 = vshrl.u32 %v173, 7
        %v175 = vsub.s32 0, %v174
        %v176 = vrot.slane %v170, %v175
        %v177 = vlaneseq
        %v178 = vshrl.u32 %v177, 7
        %v179 = vsub.s32 1, %v178
        %v180 = vrot.slane %v170, %v179
        %184 = vset.pattern.permute.xlu0 0
        %185 = vperm.xlu0 %184, %v171
        %v186 = vpop.permute.xlu0 %185
        %vm188 = vcmp.ge.f32.partialorder %v176, %v186
        %vm189 = vcmp.ge.f32.partialorder %v180, %v186
        %v190 = vsel %vm188, 1, 0
        %v191 = vsel %vm189, 1, 0
        %v192 = vcvt.s32.f32 %v190
        %v193 = vcvt.s32.f32 %v191
        %v196 = vcombine.low %v192, %v193
        %198 = vst [vmem:[%s159] sm:$0xff] %v196
        %s199 = sand.u32 %s87, 1
        %s200 = scalar_lea.sflag [#allocation3], %s199
        %s201 = sand.u32 %s87, 1
        %s202 = smul.addr %s201, 8
        %s203 = scalar_lea.vmem [#allocation2], %s202
        // Predicated region
        $region29: #{tpu_custom_call.1} parent=27 // pred_check
          %p204 = pneg %p97
        $region30: #{tpu_custom_call.1} parent=27 // pred_check_branch
          %206 = sbr.rel (%p204) target = $region32
        $region31: #{tpu_custom_call.1} parent=27 // pred_region
          %s207 = smul.u32 2, %s21
          %s209 = ssub.s32 128, 128
          %210 = vsyncadd %s200, %s209
          %s211 = smul.addr %s20, 2
          %s212 = sadd.s32 %s207, %s211
          %s213 = smul.addr %s212, 64
          %s214 = scalar_lea.hbm %s2, %s213
          %s216 = sshll.u32 %s203, 4
          %s217 = int_to_ptr.vmem [resolvable:$true] %s216
          %219 = dma.vmem_to_hbm [thread:$0]  %s217, 128, %s214, %s200
        $region32: #{tpu_custom_call.1} parent=27 // pred_fallthru
          _
      $region28: #{tpu_custom_call.1} parent=5 // pred_fallthru
        _
      %p220 = scmp.le.s32.totalorder 2, %s11
      // Predicated region
      $region33: #{tpu_custom_call.1} parent=5 // pred_check
        %p221 = pneg %p220
      $region34: #{tpu_custom_call.1} parent=5 // pred_check_branch
        %223 = sbr.rel (%p221) target = $region36
      $region35: #{tpu_custom_call.1} parent=5 // pred_region
        %s224 = ssub.s32 %s11, 2
        // Predicated region
        $region37: #{tpu_custom_call.1} parent=35 // pred_check
          %p225 = pneg %p103
        $region38: #{tpu_custom_call.1} parent=35 // pred_check_branch
          %227 = sbr.rel (%p225) target = $region40
        $region39: #{tpu_custom_call.1} parent=35 // pred_region
          %s228 = sand.u32 %s88, 1
          %s229 = scalar_lea.sflag [#allocation3], %s228
          %s230 = sand.u32 %s88, 1
          %s231 = smul.addr %s230, 8
          %s232 = scalar_lea.vmem [#allocation2], %s231
          %233 = dma.done %s229, 128
        $region40: #{tpu_custom_call.1} parent=35 // pred_fallthru
          _
      $region36: #{tpu_custom_call.1} parent=5 // pred_fallthru
        _
    $region6: #{tpu_custom_call.1} parent=1 // loop_footer
      %s15 = sadd.s32 1, %s11
    $region7: #{tpu_custom_call.1} parent=1 // loop_footer_branch
      %10 = sbr.rel target = $region3
    $region8: #{tpu_custom_call.1} parent=1 // loop_exit
      _
    %234 = vsyncpa [#allocation3], 1
    %s235 = scalar_lea.sflag [#allocation3], 1
    %236 = vsyncpa %s235, 1

</llo_original>
